<compile_context>
chip_gen: v7x
topology: tpu7x:2x2x1
jax: 0.10.0
libtpu: 0.0.40
codegen_flags: <defaults>
</compile_context>

<pallas_src>
import functools

import jax
import jax.numpy as jnp
from jax import lax
from jax.experimental import pallas as pl
from jax.experimental.pallas import tpu as pltpu


# ---------------------------------------------------------------------------
# Fused kernel: conv (im2col matmul) + bias + ReLU + FC + bias + log_softmax.
#   p_ref : (B, CK, P)   patches, feature order (c, ki, kj), spatial row-major
#   wc_ref: (OC, CK)     conv weight, matches torch w.reshape(OC, C*K*K)
#   bc_ref: (OC, 1)      conv bias
#   wf_ref: (OC, P, N)   fc weight, wf_ref[o, p, n] == w_fc[n, o*P + p]
#   bf_ref: (1, N)       fc bias
#   o_ref : (B, N)       log-probabilities
# ---------------------------------------------------------------------------
def _net_fused_kernel(p_ref, wc_ref, bc_ref, wf_ref, bf_ref, o_ref, *,
                      batch, out_ch):
    wc = wc_ref[...]                       # (OC, CK)
    bc = bc_ref[...]                       # (OC, 1)

    # Conv + bias + ReLU, channel-major: (OC, CK) x (CK, P) -> (OC, P).
    convs = [
        jnp.maximum(
            jnp.dot(wc, p_ref[b], preferred_element_type=jnp.float32) + bc,
            0.0)
        for b in range(batch)              # static unroll, B is tiny
    ]

    # FC over the torch channel-major flatten:
    #   logits[b, n] = b_fc[n] + sum_o sum_p conv_b[o, p] * wf[o, p, n]
    # One (B, P) x (P, N) matmul per conv channel: wf[o] is pushed to the MXU
    # once and reused across all samples; the (B, P) LHS is assembled from
    # per-sample sublane row slices (cheap, no relayout).
    acc = None
    for o in range(out_ch):                # static unroll, OC is tiny
        lhs_o = jnp.concatenate(
            [convs[b][o:o + 1, :] for b in range(batch)], axis=0)   # (B, P)
        part = jnp.dot(lhs_o, wf_ref[o], preferred_element_type=jnp.float32)
        acc = part if acc is None else acc + part
    logits = acc + bf_ref[...]                                      # (B, N)

    # Numerically stable log_softmax over the class axis.
    m = jnp.max(logits, axis=-1, keepdims=True)
    shifted = logits - m
    lse = jnp.log(jnp.sum(jnp.exp(shifted), axis=-1, keepdims=True))
    o_ref[...] = (shifted - lse).astype(o_ref.dtype)


def net_fused_pallas(patches, wc, bc, wf, bf):
    """patches (B, CK, P), wc (OC, CK), bc (OC, 1), wf (OC, P, N), bf (1, N)."""
    B, CK, P = patches.shape
    OC = wc.shape[0]
    N = bf.shape[1]

    kernel = functools.partial(_net_fused_kernel, batch=B, out_ch=OC)

    # TODO(synk): for large batches on v7x, split B over a "parallel" grid axis
    # to use both TensorCores; at B=2 the single fused call is fastest everywhere.
    return pl.pallas_call(
        kernel,
        out_shape=jax.ShapeDtypeStruct((B, N), jnp.float32),
        grid_spec=pltpu.PrefetchScalarGridSpec(
            num_scalar_prefetch=0,
            grid=(1,),
            in_specs=[
                pl.BlockSpec((B, CK, P), lambda i: (0, 0, 0)),
                pl.BlockSpec((OC, CK), lambda i: (0, 0)),
                pl.BlockSpec((OC, 1), lambda i: (0, 0)),
                pl.BlockSpec((OC, P, N), lambda i: (0, 0, 0)),
                pl.BlockSpec((1, N), lambda i: (0, 0)),
            ],
            out_specs=pl.BlockSpec((B, N), lambda i: (0, 0)),
        ),
        compiler_params=pltpu.CompilerParams(
            dimension_semantics=("arbitrary",)),
    )(patches, wc, bc, wf, bf)


# ---------------------------------------------------------------------------
# Glue: im2col (pure layout plumbing) + full forward pass.
# ---------------------------------------------------------------------------
def im2col_ckp(x, K, stride):
    """x (B, C, H, W) NCHW -> (B, C*K*K, OH*OW) with (c, ki, kj) feature order."""
    B, C, H, W = x.shape
    OH = (H - K) // stride + 1
    OW = (W - K) // stride + 1
    slabs = []
    for i in range(K):
        for j in range(K):
            slabs.append(x[:, :, i:i + stride * OH:stride, j:j + stride * OW:stride])
    p = jnp.stack(slabs, axis=0).reshape(K, K, B, C, OH, OW)
    p = jnp.transpose(p, (2, 3, 0, 1, 4, 5))          # (B, C, K, K, OH, OW)
    return p.reshape(B, C * K * K, OH * OW), OH, OW


@functools.partial(jax.jit, static_argnames=("kernel_size", "stride"))
def net_forward(x, w_conv, b_conv, w_fc, b_fc, *, kernel_size, stride):
    """x (B, C, H, W) NCHW f32.  Weights in torch layout:
       w_conv (OC, C, K, K), b_conv (OC,), w_fc (10, OC*OH*OW), b_fc (10,)."""
    OC = w_conv.shape[0]
    N = w_fc.shape[0]
    patches, OH, OW = im2col_ckp(x, kernel_size, stride)   # (B, CK, P)
    P = OH * OW

    wc = w_conv.reshape(OC, -1)                            # (OC, CK)
    bc = b_conv.reshape(OC, 1)                             # (OC, 1)
    # torch.flatten(conv NCHW, 1) order is f = o*P + p  ->  (OC, P, N) weight slab
    wf = jnp.transpose(w_fc).reshape(OC, P, N)             # (OC, P, N)
    bf = b_fc.reshape(1, N)                                # (1, N)

    return net_fused_pallas(patches, wc, bc, wf, bf)


# Pure-JAX reference (mirrors the PyTorch forward) for correctness checking.
def net_forward_ref(x, w_conv, b_conv, w_fc, b_fc, *, stride):
    conv = lax.conv_general_dilated(
        x, w_conv, window_strides=(stride, stride), padding="VALID",
        dimension_numbers=("NCHW", "OIHW", "NCHW"))
    conv = jax.nn.relu(conv + b_conv.reshape(1, -1, 1, 1))
    flat = conv.reshape(conv.shape[0], -1)
    logits = flat @ w_fc.T + b_fc
    return jax.nn.log_softmax(logits, axis=-1)


if __name__ == "__main__":
    # Small, deterministic problem sizes consistent with the module's CLI args.
    B, C, H = 2, 4, 16           # batch, input_channel, image_size
    OC, K, STRIDE = 8, 3, 1      # output_channel, kernel_size, stride
    OH = (H - K) // STRIDE + 1
    OUTPUT_SIZE = OH * OH * OC   # = 1568

    key = jax.random.PRNGKey(0)
    kx, kw1, kb1, kw2, kb2 = jax.random.split(key, 5)

    x = jax.random.normal(kx, (B, C, H, H), dtype=jnp.float32)
    w_conv = jax.random.normal(kw1, (OC, C, K, K), dtype=jnp.float32) * 0.1
    b_conv = jax.random.normal(kb1, (OC,), dtype=jnp.float32) * 0.1
    w_fc = jax.random.normal(kw2, (10, OUTPUT_SIZE), dtype=jnp.float32) * 0.02
    b_fc = jax.random.normal(kb2, (10,), dtype=jnp.float32) * 0.02

    out = net_forward(x, w_conv, b_conv, w_fc, b_fc,
                      kernel_size=K, stride=STRIDE)
    out = jax.block_until_ready(out)

    ref = net_forward_ref(x, w_conv, b_conv, w_fc, b_fc, stride=STRIDE)
    assert out.shape == (B, 10), out.shape
    assert jnp.allclose(out, ref, atol=1e-4, rtol=1e-4), (
        f"max abs err = {jnp.max(jnp.abs(out - ref))}")

    print("KERNEL_OK")
</pallas_src>

<mosaic_0001>
module attributes {stable_mosaic.version = 11 : i64} {
  func.func @_net_fused_kernel(%arg0: i32, %arg1: memref<2x36x196xf32, #tpu.memory_space<vmem>>, %arg2: memref<8x36xf32, #tpu.memory_space<vmem>>, %arg3: memref<8x1xf32, #tpu.memory_space<vmem>>, %arg4: memref<8x196x10xf32, #tpu.memory_space<vmem>>, %arg5: memref<1x10xf32, #tpu.memory_space<vmem>>, %arg6: memref<2x10xf32, #tpu.memory_space<vmem>>) attributes {dimension_semantics = [#tpu.dimension_semantics<arbitrary>], iteration_bounds = array<i64: 1>, scalar_prefetch = 0 : i64, scratch_operands = 0 : i64, tpu.core_type = #tpu.core_type<tc>, window_params = [{pipeline_mode = #tpu.pipeline_mode<synchronous>, transform_indices = @transform_0, window_bounds = array<i64: 2, 36, 196>}, {pipeline_mode = #tpu.pipeline_mode<synchronous>, transform_indices = @transform_1, window_bounds = array<i64: 8, 36>}, {pipeline_mode = #tpu.pipeline_mode<synchronous>, transform_indices = @transform_2, window_bounds = array<i64: 8, 1>}, {pipeline_mode = #tpu.pipeline_mode<synchronous>, transform_indices = @transform_3, window_bounds = array<i64: 8, 196, 10>}, {pipeline_mode = #tpu.pipeline_mode<synchronous>, transform_indices = @transform_4, window_bounds = array<i64: 1, 10>}, {pipeline_mode = #tpu.pipeline_mode<synchronous>, transform_indices = @transform_5, window_bounds = array<i64: 2, 10>}]} {
    %c0 = arith.constant 0 : index
    %c0_0 = arith.constant 0 : index
    %0 = vector.load %arg2[%c0, %c0_0] : memref<8x36xf32, #tpu.memory_space<vmem>>, vector<8x36xf32>
    %c0_1 = arith.constant 0 : index
    %c0_2 = arith.constant 0 : index
    %1 = vector.load %arg3[%c0_1, %c0_2] : memref<8x1xf32, #tpu.memory_space<vmem>>, vector<8x1xf32>
    %c0_3 = arith.constant 0 : index
    %c0_4 = arith.constant 0 : index
    %c0_5 = arith.constant 0 : index
    %2 = vector.load %arg1[%c0_3, %c0_4, %c0_5] : memref<2x36x196xf32, #tpu.memory_space<vmem>>, vector<1x36x196xf32>
    %3 = vector.shape_cast %2 : vector<1x36x196xf32> to vector<36x196xf32>
    %cst = arith.constant dense<0.000000e+00> : vector<8x196xf32>
    %4 = tpu.matmul %0, %3, %cst {dimension_numbers = #tpu.dot_dimension_numbers<[1], [0], [0], [1], [0, 0, 1, 1], [], []>} : vector<8x36xf32>, vector<36x196xf32>, vector<8x196xf32> -> vector<8x196xf32>
    %5 = vector.broadcast %1 : vector<8x1xf32> to vector<8x196xf32>
    %6 = arith.addf %4, %5 : vector<8x196xf32>
    %cst_6 = arith.constant 0.000000e+00 : f32
    %7 = vector.broadcast %cst_6 : f32 to vector<8x196xf32>
    %8 = arith.maximumf %6, %7 : vector<8x196xf32>
    %c1 = arith.constant 1 : index
    %c0_7 = arith.constant 0 : index
    %c0_8 = arith.constant 0 : index
    %9 = vector.load %arg1[%c1, %c0_7, %c0_8] : memref<2x36x196xf32, #tpu.memory_space<vmem>>, vector<1x36x196xf32>
    %10 = vector.shape_cast %9 : vector<1x36x196xf32> to vector<36x196xf32>
    %cst_9 = arith.constant dense<0.000000e+00> : vector<8x196xf32>
    %11 = tpu.matmul %0, %10, %cst_9 {dimension_numbers = #tpu.dot_dimension_numbers<[1], [0], [0], [1], [0, 0, 1, 1], [], []>} : vector<8x36xf32>, vector<36x196xf32>, vector<8x196xf32> -> vector<8x196xf32>
    %12 = vector.broadcast %1 : vector<8x1xf32> to vector<8x196xf32>
    %13 = arith.addf %11, %12 : vector<8x196xf32>
    %cst_10 = arith.constant 0.000000e+00 : f32
    %14 = vector.broadcast %cst_10 : f32 to vector<8x196xf32>
    %15 = arith.maximumf %13, %14 : vector<8x196xf32>
    %16 = vector.extract_strided_slice %8 {offsets = [0, 0], sizes = [1, 196], strides = [1, 1]} : vector<8x196xf32> to vector<1x196xf32>
    %17 = vector.extract_strided_slice %15 {offsets = [0, 0], sizes = [1, 196], strides = [1, 1]} : vector<8x196xf32> to vector<1x196xf32>
    %18 = tpu.concatenate %16, %17 in 0 : vector<1x196xf32>, vector<1x196xf32> -> vector<2x196xf32>
    %c0_11 = arith.constant 0 : index
    %c0_12 = arith.constant 0 : index
    %c0_13 = arith.constant 0 : index
    %19 = vector.load %arg4[%c0_11, %c0_12, %c0_13] : memref<8x196x10xf32, #tpu.memory_space<vmem>>, vector<1x196x10xf32>
    %20 = vector.shape_cast %19 : vector<1x196x10xf32> to vector<196x10xf32>
    %cst_14 = arith.constant dense<0.000000e+00> : vector<2x10xf32>
    %21 = tpu.matmul %18, %20, %cst_14 {dimension_numbers = #tpu.dot_dimension_numbers<[1], [0], [0], [1], [0, 0, 1, 1], [], []>} : vector<2x196xf32>, vector<196x10xf32>, vector<2x10xf32> -> vector<2x10xf32>
    %22 = vector.extract_strided_slice %8 {offsets = [1, 0], sizes = [1, 196], strides = [1, 1]} : vector<8x196xf32> to vector<1x196xf32>
    %23 = vector.extract_strided_slice %15 {offsets = [1, 0], sizes = [1, 196], strides = [1, 1]} : vector<8x196xf32> to vector<1x196xf32>
    %24 = tpu.concatenate %22, %23 in 0 : vector<1x196xf32>, vector<1x196xf32> -> vector<2x196xf32>
    %c1_15 = arith.constant 1 : index
    %c0_16 = arith.constant 0 : index
    %c0_17 = arith.constant 0 : index
    %25 = vector.load %arg4[%c1_15, %c0_16, %c0_17] : memref<8x196x10xf32, #tpu.memory_space<vmem>>, vector<1x196x10xf32>
    %26 = vector.shape_cast %25 : vector<1x196x10xf32> to vector<196x10xf32>
    %cst_18 = arith.constant dense<0.000000e+00> : vector<2x10xf32>
    %27 = tpu.matmul %24, %26, %cst_18 {dimension_numbers = #tpu.dot_dimension_numbers<[1], [0], [0], [1], [0, 0, 1, 1], [], []>} : vector<2x196xf32>, vector<196x10xf32>, vector<2x10xf32> -> vector<2x10xf32>
    %28 = arith.addf %21, %27 : vector<2x10xf32>
    %29 = vector.extract_strided_slice %8 {offsets = [2, 0], sizes = [1, 196], strides = [1, 1]} : vector<8x196xf32> to vector<1x196xf32>
    %30 = vector.extract_strided_slice %15 {offsets = [2, 0], sizes = [1, 196], strides = [1, 1]} : vector<8x196xf32> to vector<1x196xf32>
    %31 = tpu.concatenate %29, %30 in 0 : vector<1x196xf32>, vector<1x196xf32> -> vector<2x196xf32>
    %c2 = arith.constant 2 : index
    %c0_19 = arith.constant 0 : index
    %c0_20 = arith.constant 0 : index
    %32 = vector.load %arg4[%c2, %c0_19, %c0_20] : memref<8x196x10xf32, #tpu.memory_space<vmem>>, vector<1x196x10xf32>
    %33 = vector.shape_cast %32 : vector<1x196x10xf32> to vector<196x10xf32>
    %cst_21 = arith.constant dense<0.000000e+00> : vector<2x10xf32>
    %34 = tpu.matmul %31, %33, %cst_21 {dimension_numbers = #tpu.dot_dimension_numbers<[1], [0], [0], [1], [0, 0, 1, 1], [], []>} : vector<2x196xf32>, vector<196x10xf32>, vector<2x10xf32> -> vector<2x10xf32>
    %35 = arith.addf %28, %34 : vector<2x10xf32>
    %36 = vector.extract_strided_slice %8 {offsets = [3, 0], sizes = [1, 196], strides = [1, 1]} : vector<8x196xf32> to vector<1x196xf32>
    %37 = vector.extract_strided_slice %15 {offsets = [3, 0], sizes = [1, 196], strides = [1, 1]} : vector<8x196xf32> to vector<1x196xf32>
    %38 = tpu.concatenate %36, %37 in 0 : vector<1x196xf32>, vector<1x196xf32> -> vector<2x196xf32>
    %c3 = arith.constant 3 : index
    %c0_22 = arith.constant 0 : index
    %c0_23 = arith.constant 0 : index
    %39 = vector.load %arg4[%c3, %c0_22, %c0_23] : memref<8x196x10xf32, #tpu.memory_space<vmem>>, vector<1x196x10xf32>
    %40 = vector.shape_cast %39 : vector<1x196x10xf32> to vector<196x10xf32>
    %cst_24 = arith.constant dense<0.000000e+00> : vector<2x10xf32>
    %41 = tpu.matmul %38, %40, %cst_24 {dimension_numbers = #tpu.dot_dimension_numbers<[1], [0], [0], [1], [0, 0, 1, 1], [], []>} : vector<2x196xf32>, vector<196x10xf32>, vector<2x10xf32> -> vector<2x10xf32>
    %42 = arith.addf %35, %41 : vector<2x10xf32>
    %43 = vector.extract_strided_slice %8 {offsets = [4, 0], sizes = [1, 196], strides = [1, 1]} : vector<8x196xf32> to vector<1x196xf32>
    %44 = vector.extract_strided_slice %15 {offsets = [4, 0], sizes = [1, 196], strides = [1, 1]} : vector<8x196xf32> to vector<1x196xf32>
    %45 = tpu.concatenate %43, %44 in 0 : vector<1x196xf32>, vector<1x196xf32> -> vector<2x196xf32>
    %c4 = arith.constant 4 : index
    %c0_25 = arith.constant 0 : index
    %c0_26 = arith.constant 0 : index
    %46 = vector.load %arg4[%c4, %c0_25, %c0_26] : memref<8x196x10xf32, #tpu.memory_space<vmem>>, vector<1x196x10xf32>
    %47 = vector.shape_cast %46 : vector<1x196x10xf32> to vector<196x10xf32>
    %cst_27 = arith.constant dense<0.000000e+00> : vector<2x10xf32>
    %48 = tpu.matmul %45, %47, %cst_27 {dimension_numbers = #tpu.dot_dimension_numbers<[1], [0], [0], [1], [0, 0, 1, 1], [], []>} : vector<2x196xf32>, vector<196x10xf32>, vector<2x10xf32> -> vector<2x10xf32>
    %49 = arith.addf %42, %48 : vector<2x10xf32>
    %50 = vector.extract_strided_slice %8 {offsets = [5, 0], sizes = [1, 196], strides = [1, 1]} : vector<8x196xf32> to vector<1x196xf32>
    %51 = vector.extract_strided_slice %15 {offsets = [5, 0], sizes = [1, 196], strides = [1, 1]} : vector<8x196xf32> to vector<1x196xf32>
    %52 = tpu.concatenate %50, %51 in 0 : vector<1x196xf32>, vector<1x196xf32> -> vector<2x196xf32>
    %c5 = arith.constant 5 : index
    %c0_28 = arith.constant 0 : index
    %c0_29 = arith.constant 0 : index
    %53 = vector.load %arg4[%c5, %c0_28, %c0_29] : memref<8x196x10xf32, #tpu.memory_space<vmem>>, vector<1x196x10xf32>
    %54 = vector.shape_cast %53 : vector<1x196x10xf32> to vector<196x10xf32>
    %cst_30 = arith.constant dense<0.000000e+00> : vector<2x10xf32>
    %55 = tpu.matmul %52, %54, %cst_30 {dimension_numbers = #tpu.dot_dimension_numbers<[1], [0], [0], [1], [0, 0, 1, 1], [], []>} : vector<2x196xf32>, vector<196x10xf32>, vector<2x10xf32> -> vector<2x10xf32>
    %56 = arith.addf %49, %55 : vector<2x10xf32>
    %57 = vector.extract_strided_slice %8 {offsets = [6, 0], sizes = [1, 196], strides = [1, 1]} : vector<8x196xf32> to vector<1x196xf32>
    %58 = vector.extract_strided_slice %15 {offsets = [6, 0], sizes = [1, 196], strides = [1, 1]} : vector<8x196xf32> to vector<1x196xf32>
    %59 = tpu.concatenate %57, %58 in 0 : vector<1x196xf32>, vector<1x196xf32> -> vector<2x196xf32>
    %c6 = arith.constant 6 : index
    %c0_31 = arith.constant 0 : index
    %c0_32 = arith.constant 0 : index
    %60 = vector.load %arg4[%c6, %c0_31, %c0_32] : memref<8x196x10xf32, #tpu.memory_space<vmem>>, vector<1x196x10xf32>
    %61 = vector.shape_cast %60 : vector<1x196x10xf32> to vector<196x10xf32>
    %cst_33 = arith.constant dense<0.000000e+00> : vector<2x10xf32>
    %62 = tpu.matmul %59, %61, %cst_33 {dimension_numbers = #tpu.dot_dimension_numbers<[1], [0], [0], [1], [0, 0, 1, 1], [], []>} : vector<2x196xf32>, vector<196x10xf32>, vector<2x10xf32> -> vector<2x10xf32>
    %63 = arith.addf %56, %62 : vector<2x10xf32>
    %64 = vector.extract_strided_slice %8 {offsets = [7, 0], sizes = [1, 196], strides = [1, 1]} : vector<8x196xf32> to vector<1x196xf32>
    %65 = vector.extract_strided_slice %15 {offsets = [7, 0], sizes = [1, 196], strides = [1, 1]} : vector<8x196xf32> to vector<1x196xf32>
    %66 = tpu.concatenate %64, %65 in 0 : vector<1x196xf32>, vector<1x196xf32> -> vector<2x196xf32>
    %c7 = arith.constant 7 : index
    %c0_34 = arith.constant 0 : index
    %c0_35 = arith.constant 0 : index
    %67 = vector.load %arg4[%c7, %c0_34, %c0_35] : memref<8x196x10xf32, #tpu.memory_space<vmem>>, vector<1x196x10xf32>
    %68 = vector.shape_cast %67 : vector<1x196x10xf32> to vector<196x10xf32>
    %cst_36 = arith.constant dense<0.000000e+00> : vector<2x10xf32>
    %69 = tpu.matmul %66, %68, %cst_36 {dimension_numbers = #tpu.dot_dimension_numbers<[1], [0], [0], [1], [0, 0, 1, 1], [], []>} : vector<2x196xf32>, vector<196x10xf32>, vector<2x10xf32> -> vector<2x10xf32>
    %70 = arith.addf %63, %69 : vector<2x10xf32>
    %c0_37 = arith.constant 0 : index
    %c0_38 = arith.constant 0 : index
    %71 = vector.load %arg5[%c0_37, %c0_38] : memref<1x10xf32, #tpu.memory_space<vmem>>, vector<1x10xf32>
    %72 = vector.broadcast %71 : vector<1x10xf32> to vector<2x10xf32>
    %73 = arith.addf %70, %72 : vector<2x10xf32>
    %cst_39 = arith.constant dense<0xFF800000> : vector<2xf32>
    %74 = vector.multi_reduction <maximumf>, %73, %cst_39 [1] : vector<2x10xf32> to vector<2xf32>
    %75 = vector.shape_cast %74 : vector<2xf32> to vector<2x1xf32>
    %76 = vector.broadcast %75 : vector<2x1xf32> to vector<2x10xf32>
    %77 = arith.subf %73, %76 : vector<2x10xf32>
    %78 = math.exp %77 : vector<2x10xf32>
    %cst_40 = arith.constant dense<0.000000e+00> : vector<2xf32>
    %79 = vector.multi_reduction <add>, %78, %cst_40 [1] : vector<2x10xf32> to vector<2xf32>
    %80 = vector.shape_cast %79 : vector<2xf32> to vector<2x1xf32>
    %81 = math.log %80 : vector<2x1xf32>
    %82 = vector.broadcast %81 : vector<2x1xf32> to vector<2x10xf32>
    %83 = arith.subf %77, %82 : vector<2x10xf32>
    %c0_41 = arith.constant 0 : index
    %c0_42 = arith.constant 0 : index
    %84 = vector.load %arg6[%c0_41, %c0_42] : memref<2x10xf32, #tpu.memory_space<vmem>>, vector<2x10xf32>
    tpu.vector_store %arg6[%c0_41, %c0_42], %83 {strides = array<i32>} : memref<2x10xf32, #tpu.memory_space<vmem>>, vector<2x10xf32>,
    return
  }
  func.func @transform_0(%arg0: i32) -> (i32, i32, i32) {
    %c0_i32 = arith.constant 0 : i32
    %c0_i32_0 = arith.constant 0 : i32
    %c0_i32_1 = arith.constant 0 : i32
    %c0_i32_2 = arith.constant 0 : i32
    return %c0_i32, %c0_i32_0, %c0_i32_1 : i32, i32, i32
  }
  func.func @transform_1(%arg0: i32) -> (i32, i32) {
    %c0_i32 = arith.constant 0 : i32
    %c0_i32_0 = arith.constant 0 : i32
    %c0_i32_1 = arith.constant 0 : i32
    return %c0_i32, %c0_i32_0 : i32, i32
  }
  func.func @transform_2(%arg0: i32) -> (i32, i32) {
    %c0_i32 = arith.constant 0 : i32
    %c0_i32_0 = arith.constant 0 : i32
    %c0_i32_1 = arith.constant 0 : i32
    return %c0_i32, %c0_i32_0 : i32, i32
  }
  func.func @transform_3(%arg0: i32) -> (i32, i32, i32) {
    %c0_i32 = arith.constant 0 : i32
    %c0_i32_0 = arith.constant 0 : i32
    %c0_i32_1 = arith.constant 0 : i32
    %c0_i32_2 = arith.constant 0 : i32
    return %c0_i32, %c0_i32_0, %c0_i32_1 : i32, i32, i32
  }
  func.func @transform_4(%arg0: i32) -> (i32, i32) {
    %c0_i32 = arith.constant 0 : i32
    %c0_i32_0 = arith.constant 0 : i32
    %c0_i32_1 = arith.constant 0 : i32
    return %c0_i32, %c0_i32_0 : i32, i32
  }
  func.func @transform_5(%arg0: i32) -> (i32, i32) {
    %c0_i32 = arith.constant 0 : i32
    %c0_i32_0 = arith.constant 0 : i32
    %c0_i32_1 = arith.constant 0 : i32
    return %c0_i32, %c0_i32_0 : i32, i32
  }
}

</mosaic_0001>

<llo_original>
// kernel: net_forward.1
$region0: #{net_forward.1}
  #allocation0 [shape = 'u32[]', space=smem, size = 0x4, offset = 0x4, fixed_abs, tag = 'smem constant byte address 0x4 - core index']
  #allocation1 [shape = 'u32[144,128]{1,0:T(1,128)}', space=vmem, size = 0x12000, scoped, tag = 'internal scratch']
  %s0 = inlined_call_operand.vmem [shape: f32[2,36,196], index: 0, kind: input, shape index: {}]
  %s1 = inlined_call_operand.vmem [shape: f32[8,36], index: 1, kind: input, shape index: {}]
  %s2 = inlined_call_operand.vmem [shape: f32[8,1], index: 2, kind: input, shape index: {}]
  %s3 = inlined_call_operand.vmem [shape: f32[8,196,10], index: 3, kind: input, shape index: {}]
  %s4 = inlined_call_operand.vmem [shape: f32[1,10], index: 4, kind: input, shape index: {}]
  %s5 = inlined_call_operand.hbm [shape: f32[2,10], index: 5, kind: output, shape index: {}]
  %s6 = sld [smem:[#allocation0]]
  $region30: #{net_forward.1} parent=0
    _
  %s8 = ssub.s32 1, %s6
  %s9 = scalar_select 0, %s8, %s6
  $region1: #{net_forward.1} parent=0
    #allocation2 [shape = 'u8[1024]{0}', space=vmem, size = 0x400, scoped, tag = 'output window, operand 0, single buffered']
    #allocation3 [shape = 's32[1]{0}', space=sflag, size = 0x4, scoped, tag = 'scoped memory for net_forward.1']
    %10 = vsyncpa [#allocation3], 0
    // Predicated region
    $region2: #{net_forward.1} parent=1 // pred_check
      _
    $region3: #{net_forward.1} parent=1 // pred_check_branch
      %12 = sbr.rel (0) target = $region5
    $region4: #{net_forward.1} parent=1 // pred_region
      _
    $region5: #{net_forward.1} parent=1 // pred_fallthru
      _
    // Predicated region
    $region6: #{net_forward.1} parent=1 // pred_check
      _
    $region7: #{net_forward.1} parent=1 // pred_check_branch
      %14 = sbr.rel (0) target = $region9
    $region8: #{net_forward.1} parent=1 // pred_region
      _
    $region9: #{net_forward.1} parent=1 // pred_fallthru
      _
    // Predicated region
    $region10: #{net_forward.1} parent=1 // pred_check
      _
    $region11: #{net_forward.1} parent=1 // pred_check_branch
      %16 = sbr.rel (0) target = $region13
    $region12: #{net_forward.1} parent=1 // pred_region
      _
    $region13: #{net_forward.1} parent=1 // pred_fallthru
      _
    // Predicated region
    $region14: #{net_forward.1} parent=1 // pred_check
      _
    $region15: #{net_forward.1} parent=1 // pred_check_branch
      %18 = sbr.rel (0) target = $region17
    $region16: #{net_forward.1} parent=1 // pred_region
      _
    $region17: #{net_forward.1} parent=1 // pred_fallthru
      _
    // Predicated region
    $region18: #{net_forward.1} parent=1 // pred_check
      _
    $region19: #{net_forward.1} parent=1 // pred_check_branch
      %20 = sbr.rel (0) target = $region21
    $region20: #{net_forward.1} parent=1 // pred_region
      _
    $region21: #{net_forward.1} parent=1 // pred_fallthru
      _
    %v21 = vld [vmem:[%s1] sm:$0xff]
    %v22 = vld [vmem:[%s2] sm:$0xff]
    %v23 = vld [vmem:[%s0] sm:$0xff]
    %v24 = vld [vmem:[%s0 + $0x8] sm:$0xff]
    %v25 = vld [vmem:[%s0 + $0x10] sm:$0xff]
    %v26 = vld [vmem:[%s0 + $0x18] sm:$0xff]
    %v27 = vld [vmem:[%s0 + $0x20] sm:$0xff]
    %v28 = vld [vmem:[%s0 + $0x28] sm:$0xff]
    %v29 = vld [vmem:[%s0 + $0x30] sm:$0xff]
    %v30 = vld [vmem:[%s0 + $0x38] sm:$0xff]
    %v31 = vld [vmem:[%s0 + $0x40] sm:$0xf]
    %v32 = vld [vmem:[%s0 + $0x48] sm:$0xf]
    %34 = vset.pattern.permute.xlu0 0
    %35 = vperm.xlu0 %34, %v22
    %v36 = vpop.permute.xlu0 %35
    %vm38 = vcmask 293888
    %v40 = vsel %vm38, %v21, 0
    %vm42 = vcmask 1043456
    %v44 = vsel %vm42, %v31, 0
    %v47 = vsel %vm42, %v32, 0
    %49 = vmatprep.subr.mxu0 %v24
    %50 = vmatpush1.msra.mxu0 %v23
    %51 = vmatprep.subr.mxu0 %v26
    %52 = vmatpush1.msra.mxu0 %v25
    %53 = vmatprep.subr.mxu0 %v28
    %54 = vmatpush1.msra.mxu0 %v27
    %55 = vmatprep.subr.mxu0 %v30
    %56 = vmatpush1.msra.mxu0 %v29
    %57 = vmatprep.subr.mxu0 %v47
    %58 = vmatpush1.msra.mxu0 %v44
    %59 = vmatprep.subr.mxu0 0.0
    %60 = vmatpush1.msra.mxu0 0.0
    %61 = vmatprep.subr.mxu0 0.0
    %62 = vmatpush1.msra.mxu0 0.0
    %63 = vmatprep.subr.mxu0 0.0
    %64 = vmatpush1.msra.mxu0 0.0
    %65 = vmatprep.subr.mxu0 0.0
    %66 = vmatpush1.msra.mxu0 0.0
    %67 = vmatprep.subr.mxu0 0.0
    %68 = vmatpush1.msra.mxu0 0.0
    %69 = vmatprep.subr.mxu0 0.0
    %70 = vmatpush1.msra.mxu0 0.0
    %71 = vmatprep.subr.mxu0 0.0
    %72 = vmatpush1.msra.mxu0 0.0
    %73 = vmatprep.subr.mxu0 0.0
    %74 = vmatpush1.msra.mxu0 0.0
    %75 = vmatprep.subr.mxu0 0.0
    %76 = vmatpush1.msra.mxu0 0.0
    %77 = vmatprep.subr.mxu0 0.0
    %78 = vmatpush1.msra.mxu0 0.0
    %79 = vmatprep.subr.mxu0 0.0
    %80 = vmatpush1.msra.mxu0 0.0
    %81 = vmatprep.subr.mxu0 0.0
    %82 = vmatpush1.msra.mxu0 0.0
    %83 = vmatprep.subr.mxu0 0.0
    %84 = vmatpush1.msra.mxu0 0.0
    %85 = vmatprep.subr.mxu0 0.0
    %86 = vmatpush1.msra.mxu0 0.0
    %87 = vmatprep.subr.mxu0 0.0
    %88 = vmatpush1.msra.mxu0 0.0
    %89 = vmatprep.subr.mxu0 0.0
    %90 = vmatpush1.msra.mxu0 0.0
    %91 = vmatprep.subr.mxu0 0.0
    %92 = vmatpush1.msra.mxu0 0.0
    %93 = vmatprep.subr.mxu0 0.0
    %94 = vmatpush1.msra.mxu0 0.0
    %95 = vmatprep.subr.mxu0 0.0
    %96 = vmatpush1.msra.mxu0 0.0
    %97 = vmatprep.subr.mxu0 0.0
    %98 = vmatpush1.msra.mxu0 0.0
    %99 = vmatprep.subr.mxu0 0.0
    %100 = vmatpush1.msra.mxu0 0.0
    %101 = vmatprep.subr.mxu0 0.0
    %102 = vmatpush1.msra.mxu0 0.0
    %103 = vmatprep.subr.mxu0 0.0
    %104 = vmatpush1.msra.mxu0 0.0
    %105 = vmatprep.subr.mxu0 0.0
    %106 = vmatpush1.msra.mxu0 0.0
    %107 = vmatprep.subr.mxu0 0.0
    %108 = vmatpush1.msra.mxu0 0.0
    %109 = vmatprep.subr.mxu0 0.0
    %110 = vmatpush1.msra.mxu0 0.0
    %111 = vmatprep.subr.mxu0 0.0
    %112 = vmatpush1.msra.mxu0 0.0
    %113 = vmatprep.mubr.f32.mxu0 0.0
    %114 = vmatmul.mubr.f32.gmra.mrb[0].mxu0 %v40
    %v115 = vpop.f32.mrb[0].mxu0
    %v116 = vadd.f32 %v36, %v115
    %v117 = vpop.f32.mrb[0].mxu0
    %v118 = vadd.f32 %v36, %v117
    %119 = vdwg.mxu0
    %v120 = vmax.f32 %v116, 0.0
    %v121 = vmax.f32 %v118, 0.0
    %s122 = scalar_lea.vmem %s0, 80
    %v123 = vld [vmem:[%s122] sm:$0xff]
    %v124 = vld [vmem:[%s122 + $0x8] sm:$0xff]
    %v125 = vld [vmem:[%s122 + $0x10] sm:$0xff]
    %v126 = vld [vmem:[%s122 + $0x18] sm:$0xff]
    %v127 = vld [vmem:[%s122 + $0x20] sm:$0xff]
    %v128 = vld [vmem:[%s122 + $0x28] sm:$0xff]
    %v129 = vld [vmem:[%s122 + $0x30] sm:$0xff]
    %v130 = vld [vmem:[%s122 + $0x38] sm:$0xff]
    %v131 = vld [vmem:[%s122 + $0x40] sm:$0xf]
    %v132 = vld [vmem:[%s122 + $0x48] sm:$0xf]
    %v134 = vsel %vm42, %v131, 0
    %v137 = vsel %vm42, %v132, 0
    %139 = vmatprep.subr.mxu0 %v124
    %140 = vmatpush1.msra.mxu0 %v123
    %141 = vmatprep.subr.mxu0 %v126
    %142 = vmatpush1.msra.mxu0 %v125
    %143 = vmatprep.subr.mxu0 %v128
    %144 = vmatpush1.msra.mxu0 %v127
    %145 = vmatprep.subr.mxu0 %v130
    %146 = vmatpush1.msra.mxu0 %v129
    %147 = vmatprep.subr.mxu0 %v137
    %148 = vmatpush1.msra.mxu0 %v134
    %149 = vmatprep.subr.mxu0 0.0
    %150 = vmatpush1.msra.mxu0 0.0
    %151 = vmatprep.subr.mxu0 0.0
    %152 = vmatpush1.msra.mxu0 0.0
    %153 = vmatprep.subr.mxu0 0.0
    %154 = vmatpush1.msra.mxu0 0.0
    %155 = vmatprep.subr.mxu0 0.0
    %156 = vmatpush1.msra.mxu0 0.0
    %157 = vmatprep.subr.mxu0 0.0
    %158 = vmatpush1.msra.mxu0 0.0
    %159 = vmatprep.subr.mxu0 0.0
    %160 = vmatpush1.msra.mxu0 0.0
    %161 = vmatprep.subr.mxu0 0.0
    %162 = vmatpush1.msra.mxu0 0.0
    %163 = vmatprep.subr.mxu0 0.0
    %164 = vmatpush1.msra.mxu0 0.0
    %165 = vmatprep.subr.mxu0 0.0
    %166 = vmatpush1.msra.mxu0 0.0
    %167 = vmatprep.subr.mxu0 0.0
    %168 = vmatpush1.msra.mxu0 0.0
    %169 = vmatprep.subr.mxu0 0.0
    %170 = vmatpush1.msra.mxu0 0.0
    %171 = vmatprep.subr.mxu0 0.0
    %172 = vmatpush1.msra.mxu0 0.0
    %173 = vmatprep.subr.mxu0 0.0
    %174 = vmatpush1.msra.mxu0 0.0
    %175 = vmatprep.subr.mxu0 0.0
    %176 = vmatpush1.msra.mxu0 0.0
    %177 = vmatprep.subr.mxu0 0.0
    %178 = vmatpush1.msra.mxu0 0.0
    %179 = vmatprep.subr.mxu0 0.0
    %180 = vmatpush1.msra.mxu0 0.0
    %181 = vmatprep.subr.mxu0 0.0
    %182 = vmatpush1.msra.mxu0 0.0
    %183 = vmatprep.subr.mxu0 0.0
    %184 = vmatpush1.msra.mxu0 0.0
    %185 = vmatprep.subr.mxu0 0.0
    %186 = vmatpush1.msra.mxu0 0.0
    %187 = vmatprep.subr.mxu0 0.0
    %188 = vmatpush1.msra.mxu0 0.0
    %189 = vmatprep.subr.mxu0 0.0
    %190 = vmatpush1.msra.mxu0 0.0
    %191 = vmatprep.subr.mxu0 0.0
    %192 = vmatpush1.msra.mxu0 0.0
    %193 = vmatprep.subr.mxu0 0.0
    %194 = vmatpush1.msra.mxu0 0.0
    %195 = vmatprep.subr.mxu0 0.0
    %196 = vmatpush1.msra.mxu0 0.0
    %197 = vmatprep.subr.mxu0 0.0
    %198 = vmatpush1.msra.mxu0 0.0
    %199 = vmatprep.subr.mxu0 0.0
    %200 = vmatpush1.msra.mxu0 0.0
    %201 = vmatprep.subr.mxu0 0.0
    %202 = vmatpush1.msra.mxu0 0.0
    %203 = vmatprep.mubr.f32.mxu0 0.0
    %204 = vmatmul.mubr.f32.gmra.mrb[0].mxu0 %v40
    %v205 = vpop.f32.mrb[0].mxu0
    %v206 = vadd.f32 %v36, %v205
    %v207 = vpop.f32.mrb[0].mxu0
    %v208 = vadd.f32 %v36, %v207
    %209 = vdwg.mxu0
    %v210 = vmax.f32 %v206, 0.0
    %v211 = vmax.f32 %v208, 0.0
    %v214 = vrot.slane %v210, 7
    %v215 = vrot.slane %v211, 7
    %vm218 = vcmask 1040384
    %v219 = vsel %vm218, %v120, %v214
    %v220 = vsel %vm218, %v121, %v215
    %v221 = vld [vmem:[%s3] sm:$0xff]
    %v222 = vld [vmem:[%s3 + $0x8] sm:$0xff]
    %v223 = vld [vmem:[%s3 + $0x10] sm:$0xff]
    %v224 = vld [vmem:[%s3 + $0x18] sm:$0xff]
    %v225 = vld [vmem:[%s3 + $0x20] sm:$0xff]
    %v226 = vld [vmem:[%s3 + $0x28] sm:$0xff]
    %v227 = vld [vmem:[%s3 + $0x30] sm:$0xff]
    %v228 = vld [vmem:[%s3 + $0x38] sm:$0xff]
    %v229 = vld [vmem:[%s3 + $0x40] sm:$0xff]
    %v230 = vld [vmem:[%s3 + $0x48] sm:$0xff]
    %v231 = vld [vmem:[%s3 + $0x50] sm:$0xff]
    %v232 = vld [vmem:[%s3 + $0x58] sm:$0xff]
    %v233 = vld [vmem:[%s3 + $0x60] sm:$0xff]
    %v234 = vld [vmem:[%s3 + $0x68] sm:$0xff]
    %v235 = vld [vmem:[%s3 + $0x70] sm:$0xff]
    %v236 = vld [vmem:[%s3 + $0x78] sm:$0xff]
    %v237 = vld [vmem:[%s3 + $0x80] sm:$0xff]
    %v238 = vld [vmem:[%s3 + $0x88] sm:$0xff]
    %v239 = vld [vmem:[%s3 + $0x90] sm:$0xff]
    %v240 = vld [vmem:[%s3 + $0x98] sm:$0xff]
    %v241 = vld [vmem:[%s3 + $0xa0] sm:$0xff]
    %v242 = vld [vmem:[%s3 + $0xa8] sm:$0xff]
    %v243 = vld [vmem:[%s3 + $0xb0] sm:$0xff]
    %v244 = vld [vmem:[%s3 + $0xb8] sm:$0xff]
    %v245 = vld [vmem:[%s3 + $0xc0] sm:$0xf]
    %v248 = vrot.slane %v120, 1
    %v249 = vrot.slane %v121, 1
    %v252 = vsel %vm218, %v248, %v210
    %v253 = vsel %vm218, %v249, %v211
    %s254 = scalar_lea.vmem %s3, 200
    %v255 = vld [vmem:[%s254] sm:$0xff]
    %v256 = vld [vmem:[%s254 + $0x8] sm:$0xff]
    %v257 = vld [vmem:[%s254 + $0x10] sm:$0xff]
    %v258 = vld [vmem:[%s254 + $0x18] sm:$0xff]
    %v259 = vld [vmem:[%s254 + $0x20] sm:$0xff]
    %v260 = vld [vmem:[%s254 + $0x28] sm:$0xff]
    %v261 = vld [vmem:[%s254 + $0x30] sm:$0xff]
    %v262 = vld [vmem:[%s254 + $0x38] sm:$0xff]
    %v263 = vld [vmem:[%s254 + $0x40] sm:$0xff]
    %v264 = vld [vmem:[%s254 + $0x48] sm:$0xff]
    %v265 = vld [vmem:[%s254 + $0x50] sm:$0xff]
    %v266 = vld [vmem:[%s254 + $0x58] sm:$0xff]
    %v267 = vld [vmem:[%s254 + $0x60] sm:$0xff]
    %v268 = vld [vmem:[%s254 + $0x68] sm:$0xff]
    %v269 = vld [vmem:[%s254 + $0x70] sm:$0xff]
    %v270 = vld [vmem:[%s254 + $0x78] sm:$0xff]
    %v271 = vld [vmem:[%s254 + $0x80] sm:$0xff]
    %v272 = vld [vmem:[%s254 + $0x88] sm:$0xff]
    %v273 = vld [vmem:[%s254 + $0x90] sm:$0xff]
    %v274 = vld [vmem:[%s254 + $0x98] sm:$0xff]
    %v275 = vld [vmem:[%s254 + $0xa0] sm:$0xff]
    %v276 = vld [vmem:[%s254 + $0xa8] sm:$0xff]
    %v277 = vld [vmem:[%s254 + $0xb0] sm:$0xff]
    %v278 = vld [vmem:[%s254 + $0xb8] sm:$0xff]
    %v279 = vld [vmem:[%s254 + $0xc0] sm:$0xf]
    %vm280 = vcmask 556032
    %v282 = vsel %vm280, %v253, 0
    %v285 = vsel %vm42, %v279, 0
    %287 = vmatprep.subr.mxu0 0.0
    %288 = vmatpush1.msra.mxu0 %v255
    %289 = vmatprep.subr.mxu0 0.0
    %290 = vmatpush1.msra.mxu0 %v256
    %291 = vmatprep.subr.mxu0 0.0
    %292 = vmatpush1.msra.mxu0 %v257
    %293 = vmatprep.subr.mxu0 0.0
    %294 = vmatpush1.msra.mxu0 %v258
    %295 = vmatprep.subr.mxu0 0.0
    %296 = vmatpush1.msra.mxu0 %v259
    %297 = vmatprep.subr.mxu0 0.0
    %298 = vmatpush1.msra.mxu0 %v260
    %299 = vmatprep.subr.mxu0 0.0
    %300 = vmatpush1.msra.mxu0 %v261
    %301 = vmatprep.subr.mxu0 0.0
    %302 = vmatpush1.msra.mxu0 %v262
    %303 = vmatprep.subr.mxu0 0.0
    %304 = vmatpush1.msra.mxu0 %v263
    %305 = vmatprep.subr.mxu0 0.0
    %306 = vmatpush1.msra.mxu0 %v264
    %307 = vmatprep.subr.mxu0 0.0
    %308 = vmatpush1.msra.mxu0 %v265
    %309 = vmatprep.subr.mxu0 0.0
    %310 = vmatpush1.msra.mxu0 %v266
    %311 = vmatprep.subr.mxu0 0.0
    %312 = vmatpush1.msra.mxu0 %v267
    %313 = vmatprep.subr.mxu0 0.0
    %314 = vmatpush1.msra.mxu0 %v268
    %315 = vmatprep.subr.mxu0 0.0
    %316 = vmatpush1.msra.mxu0 %v269
    %317 = vmatprep.subr.mxu0 0.0
    %318 = vmatpush1.msra.mxu0 %v270
    %319 = vmatprep.subr.mxu0 0.0
    %320 = vmatpush1.msra.mxu0 %v271
    %321 = vmatprep.subr.mxu0 0.0
    %322 = vmatpush1.msra.mxu0 %v272
    %323 = vmatprep.subr.mxu0 0.0
    %324 = vmatpush1.msra.mxu0 %v273
    %325 = vmatprep.subr.mxu0 0.0
    %326 = vmatpush1.msra.mxu0 %v274
    %327 = vmatprep.subr.mxu0 0.0
    %328 = vmatpush1.msra.mxu0 %v275
    %329 = vmatprep.subr.mxu0 0.0
    %330 = vmatpush1.msra.mxu0 %v276
    %331 = vmatprep.subr.mxu0 0.0
    %332 = vmatpush1.msra.mxu0 %v277
    %333 = vmatprep.subr.mxu0 0.0
    %334 = vmatpush1.msra.mxu0 %v278
    %335 = vmatprep.subr.mxu0 0.0
    %336 = vmatpush1.msra.mxu0 %v285
    %337 = vmatprep.subr.mxu0 0.0
    %338 = vmatpush1.msra.mxu0 0.0
    %339 = vmatprep.subr.mxu0 0.0
    %340 = vmatpush1.msra.mxu0 0.0
    %341 = vmatprep.subr.mxu0 0.0
    %342 = vmatpush1.msra.mxu0 0.0
    %343 = vmatprep.subr.mxu0 0.0
    %344 = vmatpush1.msra.mxu0 0.0
    %345 = vmatprep.subr.mxu0 0.0
    %346 = vmatpush1.msra.mxu0 0.0
    %347 = vmatprep.subr.mxu0 0.0
    %348 = vmatpush1.msra.mxu0 0.0
    %349 = vmatprep.subr.mxu0 0.0
    %350 = vmatpush1.msra.mxu0 0.0
    %351 = vmatprep.mubr.f32.mxu0 %v282
    %352 = vmatmul.mubr.f32.gmra.mrb[0].mxu0 %v252
    %v353 = vpop.f32.mrb[0].mxu0
    %v354 = vadd.f32 0.0, %v353
    %v355 = vpop.f32.mrb[0].mxu0
    %356 = vdwg.mxu0
    %v358 = vsel %vm280, %v220, 0
    %v361 = vsel %vm42, %v245, 0
    %363 = vmatprep.subr.mxu0 0.0
    %364 = vmatpush1.msra.mxu0 %v221
    %365 = vmatprep.subr.mxu0 0.0
    %366 = vmatpush1.msra.mxu0 %v222
    %367 = vmatprep.subr.mxu0 0.0
    %368 = vmatpush1.msra.mxu0 %v223
    %369 = vmatprep.subr.mxu0 0.0
    %370 = vmatpush1.msra.mxu0 %v224
    %371 = vmatprep.subr.mxu0 0.0
    %372 = vmatpush1.msra.mxu0 %v225
    %373 = vmatprep.subr.mxu0 0.0
    %374 = vmatpush1.msra.mxu0 %v226
    %375 = vmatprep.subr.mxu0 0.0
    %376 = vmatpush1.msra.mxu0 %v227
    %377 = vmatprep.subr.mxu0 0.0
    %378 = vmatpush1.msra.mxu0 %v228
    %379 = vmatprep.subr.mxu0 0.0
    %380 = vmatpush1.msra.mxu0 %v229
    %381 = vmatprep.subr.mxu0 0.0
    %382 = vmatpush1.msra.mxu0 %v230
    %383 = vmatprep.subr.mxu0 0.0
    %384 = vmatpush1.msra.mxu0 %v231
    %385 = vmatprep.subr.mxu0 0.0
    %386 = vmatpush1.msra.mxu0 %v232
    %387 = vmatprep.subr.mxu0 0.0
    %388 = vmatpush1.msra.mxu0 %v233
    %389 = vmatprep.subr.mxu0 0.0
    %390 = vmatpush1.msra.mxu0 %v234
    %391 = vmatprep.subr.mxu0 0.0
    %392 = vmatpush1.msra.mxu0 %v235
    %393 = vmatprep.subr.mxu0 0.0
    %394 = vmatpush1.msra.mxu0 %v236
    %395 = vmatprep.subr.mxu0 0.0
    %396 = vmatpush1.msra.mxu0 %v237
    %397 = vmatprep.subr.mxu0 0.0
    %398 = vmatpush1.msra.mxu0 %v238
    %399 = vmatprep.subr.mxu0 0.0
    %400 = vmatpush1.msra.mxu0 %v239
    %401 = vmatprep.subr.mxu0 0.0
    %402 = vmatpush1.msra.mxu0 %v240
    %403 = vmatprep.subr.mxu0 0.0
    %404 = vmatpush1.msra.mxu0 %v241
    %405 = vmatprep.subr.mxu0 0.0
    %406 = vmatpush1.msra.mxu0 %v242
    %407 = vmatprep.subr.mxu0 0.0
    %408 = vmatpush1.msra.mxu0 %v243
    %409 = vmatprep.subr.mxu0 0.0
    %410 = vmatpush1.msra.mxu0 %v244
    %411 = vmatprep.subr.mxu0 0.0
    %412 = vmatpush1.msra.mxu0 %v361
    %413 = vmatprep.subr.mxu0 0.0
    %414 = vmatpush1.msra.mxu0 0.0
    %415 = vmatprep.subr.mxu0 0.0
    %416 = vmatpush1.msra.mxu0 0.0
    %417 = vmatprep.subr.mxu0 0.0
    %418 = vmatpush1.msra.mxu0 0.0
    %419 = vmatprep.subr.mxu0 0.0
    %420 = vmatpush1.msra.mxu0 0.0
    %421 = vmatprep.subr.mxu0 0.0
    %422 = vmatpush1.msra.mxu0 0.0
    %423 = vmatprep.subr.mxu0 0.0
    %424 = vmatpush1.msra.mxu0 0.0
    %425 = vmatprep.subr.mxu0 0.0
    %426 = vmatpush1.msra.mxu0 0.0
    %427 = vmatprep.mubr.f32.mxu0 %v358
    %428 = vmatmul.mubr.f32.gmra.mrb[0].mxu0 %v219
    %v429 = vpop.f32.mrb[0].mxu0
    %v430 = vadd.f32 %v354, %v429
    %v431 = vpop.f32.mrb[0].mxu0
    %432 = vdwg.mxu0
    %v433 = vrot.slane %v120, 2
    %v434 = vrot.slane %v121, 2
    %v437 = vrot.slane %v210, 1
    %v438 = vrot.slane %v211, 1
    %v441 = vsel %vm218, %v433, %v437
    %v442 = vsel %vm218, %v434, %v438
    %s443 = scalar_lea.vmem %s3, 400
    %v444 = vld [vmem:[%s443] sm:$0xff]
    %v445 = vld [vmem:[%s443 + $0x8] sm:$0xff]
    %v446 = vld [vmem:[%s443 + $0x10] sm:$0xff]
    %v447 = vld [vmem:[%s443 + $0x18] sm:$0xff]
    %v448 = vld [vmem:[%s443 + $0x20] sm:$0xff]
    %v449 = vld [vmem:[%s443 + $0x28] sm:$0xff]
    %v450 = vld [vmem:[%s443 + $0x30] sm:$0xff]
    %v451 = vld [vmem:[%s443 + $0x38] sm:$0xff]
    %v452 = vld [vmem:[%s443 + $0x40] sm:$0xff]
    %v453 = vld [vmem:[%s443 + $0x48] sm:$0xff]
    %v454 = vld [vmem:[%s443 + $0x50] sm:$0xff]
    %v455 = vld [vmem:[%s443 + $0x58] sm:$0xff]
    %v456 = vld [vmem:[%s443 + $0x60] sm:$0xff]
    %v457 = vld [vmem:[%s443 + $0x68] sm:$0xff]
    %v458 = vld [vmem:[%s443 + $0x70] sm:$0xff]
    %v459 = vld [vmem:[%s443 + $0x78] sm:$0xff]
    %v460 = vld [vmem:[%s443 + $0x80] sm:$0xff]
    %v461 = vld [vmem:[%s443 + $0x88] sm:$0xff]
    %v462 = vld [vmem:[%s443 + $0x90] sm:$0xff]
    %v463 = vld [vmem:[%s443 + $0x98] sm:$0xff]
    %v464 = vld [vmem:[%s443 + $0xa0] sm:$0xff]
    %v465 = vld [vmem:[%s443 + $0xa8] sm:$0xff]
    %v466 = vld [vmem:[%s443 + $0xb0] sm:$0xff]
    %v467 = vld [vmem:[%s443 + $0xb8] sm:$0xff]
    %v468 = vld [vmem:[%s443 + $0xc0] sm:$0xf]
    %v470 = vsel %vm280, %v442, 0
    %v473 = vsel %vm42, %v468, 0
    %475 = vmatprep.subr.mxu0 0.0
    %476 = vmatpush1.msra.mxu0 %v444
    %477 = vmatprep.subr.mxu0 0.0
    %478 = vmatpush1.msra.mxu0 %v445
    %479 = vmatprep.subr.mxu0 0.0
    %480 = vmatpush1.msra.mxu0 %v446
    %481 = vmatprep.subr.mxu0 0.0
    %482 = vmatpush1.msra.mxu0 %v447
    %483 = vmatprep.subr.mxu0 0.0
    %484 = vmatpush1.msra.mxu0 %v448
    %485 = vmatprep.subr.mxu0 0.0
    %486 = vmatpush1.msra.mxu0 %v449
    %487 = vmatprep.subr.mxu0 0.0
    %488 = vmatpush1.msra.mxu0 %v450
    %489 = vmatprep.subr.mxu0 0.0
    %490 = vmatpush1.msra.mxu0 %v451
    %491 = vmatprep.subr.mxu0 0.0
    %492 = vmatpush1.msra.mxu0 %v452
    %493 = vmatprep.subr.mxu0 0.0
    %494 = vmatpush1.msra.mxu0 %v453
    %495 = vmatprep.subr.mxu0 0.0
    %496 = vmatpush1.msra.mxu0 %v454
    %497 = vmatprep.subr.mxu0 0.0
    %498 = vmatpush1.msra.mxu0 %v455
    %499 = vmatprep.subr.mxu0 0.0
    %500 = vmatpush1.msra.mxu0 %v456
    %501 = vmatprep.subr.mxu0 0.0
    %502 = vmatpush1.msra.mxu0 %v457
    %503 = vmatprep.subr.mxu0 0.0
    %504 = vmatpush1.msra.mxu0 %v458
    %505 = vmatprep.subr.mxu0 0.0
    %506 = vmatpush1.msra.mxu0 %v459
    %507 = vmatprep.subr.mxu0 0.0
    %508 = vmatpush1.msra.mxu0 %v460
    %509 = vmatprep.subr.mxu0 0.0
    %510 = vmatpush1.msra.mxu0 %v461
    %511 = vmatprep.subr.mxu0 0.0
    %512 = vmatpush1.msra.mxu0 %v462
    %513 = vmatprep.subr.mxu0 0.0
    %514 = vmatpush1.msra.mxu0 %v463
    %515 = vmatprep.subr.mxu0 0.0
    %516 = vmatpush1.msra.mxu0 %v464
    %517 = vmatprep.subr.mxu0 0.0
    %518 = vmatpush1.msra.mxu0 %v465
    %519 = vmatprep.subr.mxu0 0.0
    %520 = vmatpush1.msra.mxu0 %v466
    %521 = vmatprep.subr.mxu0 0.0
    %522 = vmatpush1.msra.mxu0 %v467
    %523 = vmatprep.subr.mxu0 0.0
    %524 = vmatpush1.msra.mxu0 %v473
    %525 = vmatprep.subr.mxu0 0.0
    %526 = vmatpush1.msra.mxu0 0.0
    %527 = vmatprep.subr.mxu0 0.0
    %528 = vmatpush1.msra.mxu0 0.0
    %529 = vmatprep.subr.mxu0 0.0
    %530 = vmatpush1.msra.mxu0 0.0
    %531 = vmatprep.subr.mxu0 0.0
    %532 = vmatpush1.msra.mxu0 0.0
    %533 = vmatprep.subr.mxu0 0.0
    %534 = vmatpush1.msra.mxu0 0.0
    %535 = vmatprep.subr.mxu0 0.0
    %536 = vmatpush1.msra.mxu0 0.0
    %537 = vmatprep.subr.mxu0 0.0
    %538 = vmatpush1.msra.mxu0 0.0
    %539 = vmatprep.mubr.f32.mxu0 %v470
    %540 = vmatmul.mubr.f32.gmra.mrb[0].mxu0 %v441
    %v541 = vpop.f32.mrb[0].mxu0
    %v542 = vadd.f32 0.0, %v541
    %v543 = vpop.f32.mrb[0].mxu0
    %544 = vdwg.mxu0
    %v545 = vadd.f32 %v430, %v542
    %v546 = vrot.slane %v120, 3
    %v547 = vrot.slane %v121, 3
    %v550 = vrot.slane %v210, 2
    %v551 = vrot.slane %v211, 2
    %v554 = vsel %vm218, %v546, %v550
    %v555 = vsel %vm218, %v547, %v551
    %s556 = scalar_lea.vmem %s3, 600
    %v557 = vld [vmem:[%s556] sm:$0xff]
    %v558 = vld [vmem:[%s556 + $0x8] sm:$0xff]
    %v559 = vld [vmem:[%s556 + $0x10] sm:$0xff]
    %v560 = vld [vmem:[%s556 + $0x18] sm:$0xff]
    %v561 = vld [vmem:[%s556 + $0x20] sm:$0xff]
    %v562 = vld [vmem:[%s556 + $0x28] sm:$0xff]
    %v563 = vld [vmem:[%s556 + $0x30] sm:$0xff]
    %v564 = vld [vmem:[%s556 + $0x38] sm:$0xff]
    %v565 = vld [vmem:[%s556 + $0x40] sm:$0xff]
    %v566 = vld [vmem:[%s556 + $0x48] sm:$0xff]
    %v567 = vld [vmem:[%s556 + $0x50] sm:$0xff]
    %v568 = vld [vmem:[%s556 + $0x58] sm:$0xff]
    %v569 = vld [vmem:[%s556 + $0x60] sm:$0xff]
    %v570 = vld [vmem:[%s556 + $0x68] sm:$0xff]
    %v571 = vld [vmem:[%s556 + $0x70] sm:$0xff]
    %v572 = vld [vmem:[%s556 + $0x78] sm:$0xff]
    %v573 = vld [vmem:[%s556 + $0x80] sm:$0xff]
    %v574 = vld [vmem:[%s556 + $0x88] sm:$0xff]
    %v575 = vld [vmem:[%s556 + $0x90] sm:$0xff]
    %v576 = vld [vmem:[%s556 + $0x98] sm:$0xff]
    %v577 = vld [vmem:[%s556 + $0xa0] sm:$0xff]
    %v578 = vld [vmem:[%s556 + $0xa8] sm:$0xff]
    %v579 = vld [vmem:[%s556 + $0xb0] sm:$0xff]
    %v580 = vld [vmem:[%s556 + $0xb8] sm:$0xff]
    %v581 = vld [vmem:[%s556 + $0xc0] sm:$0xf]
    %v583 = vsel %vm280, %v555, 0
    %v586 = vsel %vm42, %v581, 0
    %588 = vmatprep.subr.mxu0 0.0
    %589 = vmatpush1.msra.mxu0 %v557
    %590 = vmatprep.subr.mxu0 0.0
    %591 = vmatpush1.msra.mxu0 %v558
    %592 = vmatprep.subr.mxu0 0.0
    %593 = vmatpush1.msra.mxu0 %v559
    %594 = vmatprep.subr.mxu0 0.0
    %595 = vmatpush1.msra.mxu0 %v560
    %596 = vmatprep.subr.mxu0 0.0
    %597 = vmatpush1.msra.mxu0 %v561
    %598 = vmatprep.subr.mxu0 0.0
    %599 = vmatpush1.msra.mxu0 %v562
    %600 = vmatprep.subr.mxu0 0.0
    %601 = vmatpush1.msra.mxu0 %v563
    %602 = vmatprep.subr.mxu0 0.0
    %603 = vmatpush1.msra.mxu0 %v564
    %604 = vmatprep.subr.mxu0 0.0
    %605 = vmatpush1.msra.mxu0 %v565
    %606 = vmatprep.subr.mxu0 0.0
    %607 = vmatpush1.msra.mxu0 %v566
    %608 = vmatprep.subr.mxu0 0.0
    %609 = vmatpush1.msra.mxu0 %v567
    %610 = vmatprep.subr.mxu0 0.0
    %611 = vmatpush1.msra.mxu0 %v568
    %612 = vmatprep.subr.mxu0 0.0
    %613 = vmatpush1.msra.mxu0 %v569
    %614 = vmatprep.subr.mxu0 0.0
    %615 = vmatpush1.msra.mxu0 %v570
    %616 = vmatprep.subr.mxu0 0.0
    %617 = vmatpush1.msra.mxu0 %v571
    %618 = vmatprep.subr.mxu0 0.0
    %619 = vmatpush1.msra.mxu0 %v572
    %620 = vmatprep.subr.mxu0 0.0
    %621 = vmatpush1.msra.mxu0 %v573
    %622 = vmatprep.subr.mxu0 0.0
    %623 = vmatpush1.msra.mxu0 %v574
    %624 = vmatprep.subr.mxu0 0.0
    %625 = vmatpush1.msra.mxu0 %v575
    %626 = vmatprep.subr.mxu0 0.0
    %627 = vmatpush1.msra.mxu0 %v576
    %628 = vmatprep.subr.mxu0 0.0
    %629 = vmatpush1.msra.mxu0 %v577
    %630 = vmatprep.subr.mxu0 0.0
    %631 = vmatpush1.msra.mxu0 %v578
    %632 = vmatprep.subr.mxu0 0.0
    %633 = vmatpush1.msra.mxu0 %v579
    %634 = vmatprep.subr.mxu0 0.0
    %635 = vmatpush1.msra.mxu0 %v580
    %636 = vmatprep.subr.mxu0 0.0
    %637 = vmatpush1.msra.mxu0 %v586
    %638 = vmatprep.subr.mxu0 0.0
    %639 = vmatpush1.msra.mxu0 0.0
    %640 = vmatprep.subr.mxu0 0.0
    %641 = vmatpush1.msra.mxu0 0.0
    %642 = vmatprep.subr.mxu0 0.0
    %643 = vmatpush1.msra.mxu0 0.0
    %644 = vmatprep.subr.mxu0 0.0
    %645 = vmatpush1.msra.mxu0 0.0
    %646 = vmatprep.subr.mxu0 0.0
    %647 = vmatpush1.msra.mxu0 0.0
    %648 = vmatprep.subr.mxu0 0.0
    %649 = vmatpush1.msra.mxu0 0.0
    %650 = vmatprep.subr.mxu0 0.0
    %651 = vmatpush1.msra.mxu0 0.0
    %652 = vmatprep.mubr.f32.mxu0 %v583
    %653 = vmatmul.mubr.f32.gmra.mrb[0].mxu0 %v554
    %v654 = vpop.f32.mrb[0].mxu0
    %v655 = vadd.f32 0.0, %v654
    %v656 = vpop.f32.mrb[0].mxu0
    %657 = vdwg.mxu0
    %v658 = vadd.f32 %v545, %v655
    %v659 = vrot.slane %v120, 4
    %v660 = vrot.slane %v121, 4
    %v663 = vrot.slane %v210, 3
    %v664 = vrot.slane %v211, 3
    %v667 = vsel %vm218, %v659, %v663
    %v668 = vsel %vm218, %v660, %v664
    %s669 = scalar_lea.vmem %s3, 800
    %v670 = vld [vmem:[%s669] sm:$0xff]
    %v671 = vld [vmem:[%s669 + $0x8] sm:$0xff]
    %v672 = vld [vmem:[%s669 + $0x10] sm:$0xff]
    %v673 = vld [vmem:[%s669 + $0x18] sm:$0xff]
    %v674 = vld [vmem:[%s669 + $0x20] sm:$0xff]
    %v675 = vld [vmem:[%s669 + $0x28] sm:$0xff]
    %v676 = vld [vmem:[%s669 + $0x30] sm:$0xff]
    %v677 = vld [vmem:[%s669 + $0x38] sm:$0xff]
    %v678 = vld [vmem:[%s669 + $0x40] sm:$0xff]
    %v679 = vld [vmem:[%s669 + $0x48] sm:$0xff]
    %v680 = vld [vmem:[%s669 + $0x50] sm:$0xff]
    %v681 = vld [vmem:[%s669 + $0x58] sm:$0xff]
    %v682 = vld [vmem:[%s669 + $0x60] sm:$0xff]
    %v683 = vld [vmem:[%s669 + $0x68] sm:$0xff]
    %v684 = vld [vmem:[%s669 + $0x70] sm:$0xff]
    %v685 = vld [vmem:[%s669 + $0x78] sm:$0xff]
    %v686 = vld [vmem:[%s669 + $0x80] sm:$0xff]
    %v687 = vld [vmem:[%s669 + $0x88] sm:$0xff]
    %v688 = vld [vmem:[%s669 + $0x90] sm:$0xff]
    %v689 = vld [vmem:[%s669 + $0x98] sm:$0xff]
    %v690 = vld [vmem:[%s669 + $0xa0] sm:$0xff]
    %v691 = vld [vmem:[%s669 + $0xa8] sm:$0xff]
    %v692 = vld [vmem:[%s669 + $0xb0] sm:$0xff]
    %v693 = vld [vmem:[%s669 + $0xb8] sm:$0xff]
    %v694 = vld [vmem:[%s669 + $0xc0] sm:$0xf]
    %v696 = vsel %vm280, %v668, 0
    %v699 = vsel %vm42, %v694, 0
    %701 = vmatprep.subr.mxu0 0.0
    %702 = vmatpush1.msra.mxu0 %v670
    %703 = vmatprep.subr.mxu0 0.0
    %704 = vmatpush1.msra.mxu0 %v671
    %705 = vmatprep.subr.mxu0 0.0
    %706 = vmatpush1.msra.mxu0 %v672
    %707 = vmatprep.subr.mxu0 0.0
    %708 = vmatpush1.msra.mxu0 %v673
    %709 = vmatprep.subr.mxu0 0.0
    %710 = vmatpush1.msra.mxu0 %v674
    %711 = vmatprep.subr.mxu0 0.0
    %712 = vmatpush1.msra.mxu0 %v675
    %713 = vmatprep.subr.mxu0 0.0
    %714 = vmatpush1.msra.mxu0 %v676
    %715 = vmatprep.subr.mxu0 0.0
    %716 = vmatpush1.msra.mxu0 %v677
    %717 = vmatprep.subr.mxu0 0.0
    %718 = vmatpush1.msra.mxu0 %v678
    %719 = vmatprep.subr.mxu0 0.0
    %720 = vmatpush1.msra.mxu0 %v679
    %721 = vmatprep.subr.mxu0 0.0
    %722 = vmatpush1.msra.mxu0 %v680
    %723 = vmatprep.subr.mxu0 0.0
    %724 = vmatpush1.msra.mxu0 %v681
    %725 = vmatprep.subr.mxu0 0.0
    %726 = vmatpush1.msra.mxu0 %v682
    %727 = vmatprep.subr.mxu0 0.0
    %728 = vmatpush1.msra.mxu0 %v683
    %729 = vmatprep.subr.mxu0 0.0
    %730 = vmatpush1.msra.mxu0 %v684
    %731 = vmatprep.subr.mxu0 0.0
    %732 = vmatpush1.msra.mxu0 %v685
    %733 = vmatprep.subr.mxu0 0.0
    %734 = vmatpush1.msra.mxu0 %v686
    %735 = vmatprep.subr.mxu0 0.0
    %736 = vmatpush1.msra.mxu0 %v687
    %737 = vmatprep.subr.mxu0 0.0
    %738 = vmatpush1.msra.mxu0 %v688
    %739 = vmatprep.subr.mxu0 0.0
    %740 = vmatpush1.msra.mxu0 %v689
    %741 = vmatprep.subr.mxu0 0.0
    %742 = vmatpush1.msra.mxu0 %v690
    %743 = vmatprep.subr.mxu0 0.0
    %744 = vmatpush1.msra.mxu0 %v691
    %745 = vmatprep.subr.mxu0 0.0
    %746 = vmatpush1.msra.mxu0 %v692
    %747 = vmatprep.subr.mxu0 0.0
    %748 = vmatpush1.msra.mxu0 %v693
    %749 = vmatprep.subr.mxu0 0.0
    %750 = vmatpush1.msra.mxu0 %v699
    %751 = vmatprep.subr.mxu0 0.0
    %752 = vmatpush1.msra.mxu0 0.0
    %753 = vmatprep.subr.mxu0 0.0
    %754 = vmatpush1.msra.mxu0 0.0
    %755 = vmatprep.subr.mxu0 0.0
    %756 = vmatpush1.msra.mxu0 0.0
    %757 = vmatprep.subr.mxu0 0.0
    %758 = vmatpush1.msra.mxu0 0.0
    %759 = vmatprep.subr.mxu0 0.0
    %760 = vmatpush1.msra.mxu0 0.0
    %761 = vmatprep.subr.mxu0 0.0
    %762 = vmatpush1.msra.mxu0 0.0
    %763 = vmatprep.subr.mxu0 0.0
    %764 = vmatpush1.msra.mxu0 0.0
    %765 = vmatprep.mubr.f32.mxu0 %v696
    %766 = vmatmul.mubr.f32.gmra.mrb[0].mxu0 %v667
    %v767 = vpop.f32.mrb[0].mxu0
    %v768 = vadd.f32 0.0, %v767
    %v769 = vpop.f32.mrb[0].mxu0
    %770 = vdwg.mxu0
    %v771 = vadd.f32 %v658, %v768
    %v772 = vrot.slane %v120, 5
    %v773 = vrot.slane %v121, 5
    %v776 = vrot.slane %v210, 4
    %v777 = vrot.slane %v211, 4
    %v780 = vsel %vm218, %v772, %v776
    %v781 = vsel %vm218, %v773, %v777
    %s782 = scalar_lea.vmem %s3, 1000
    %v783 = vld [vmem:[%s782] sm:$0xff]
    %v784 = vld [vmem:[%s782 + $0x8] sm:$0xff]
    %v785 = vld [vmem:[%s782 + $0x10] sm:$0xff]
    %v786 = vld [vmem:[%s782 + $0x18] sm:$0xff]
    %v787 = vld [vmem:[%s782 + $0x20] sm:$0xff]
    %v788 = vld [vmem:[%s782 + $0x28] sm:$0xff]
    %v789 = vld [vmem:[%s782 + $0x30] sm:$0xff]
    %v790 = vld [vmem:[%s782 + $0x38] sm:$0xff]
    %v791 = vld [vmem:[%s782 + $0x40] sm:$0xff]
    %v792 = vld [vmem:[%s782 + $0x48] sm:$0xff]
    %v793 = vld [vmem:[%s782 + $0x50] sm:$0xff]
    %v794 = vld [vmem:[%s782 + $0x58] sm:$0xff]
    %v795 = vld [vmem:[%s782 + $0x60] sm:$0xff]
    %v796 = vld [vmem:[%s782 + $0x68] sm:$0xff]
    %v797 = vld [vmem:[%s782 + $0x70] sm:$0xff]
    %v798 = vld [vmem:[%s782 + $0x78] sm:$0xff]
    %v799 = vld [vmem:[%s782 + $0x80] sm:$0xff]
    %v800 = vld [vmem:[%s782 + $0x88] sm:$0xff]
    %v801 = vld [vmem:[%s782 + $0x90] sm:$0xff]
    %v802 = vld [vmem:[%s782 + $0x98] sm:$0xff]
    %v803 = vld [vmem:[%s782 + $0xa0] sm:$0xff]
    %v804 = vld [vmem:[%s782 + $0xa8] sm:$0xff]
    %v805 = vld [vmem:[%s782 + $0xb0] sm:$0xff]
    %v806 = vld [vmem:[%s782 + $0xb8] sm:$0xff]
    %v807 = vld [vmem:[%s782 + $0xc0] sm:$0xf]
    %v809 = vsel %vm280, %v781, 0
    %v812 = vsel %vm42, %v807, 0
    %814 = vmatprep.subr.mxu0 0.0
    %815 = vmatpush1.msra.mxu0 %v783
    %816 = vmatprep.subr.mxu0 0.0
    %817 = vmatpush1.msra.mxu0 %v784
    %818 = vmatprep.subr.mxu0 0.0
    %819 = vmatpush1.msra.mxu0 %v785
    %820 = vmatprep.subr.mxu0 0.0
    %821 = vmatpush1.msra.mxu0 %v786
    %822 = vmatprep.subr.mxu0 0.0
    %823 = vmatpush1.msra.mxu0 %v787
    %824 = vmatprep.subr.mxu0 0.0
    %825 = vmatpush1.msra.mxu0 %v788
    %826 = vmatprep.subr.mxu0 0.0
    %827 = vmatpush1.msra.mxu0 %v789
    %828 = vmatprep.subr.mxu0 0.0
    %829 = vmatpush1.msra.mxu0 %v790
    %830 = vmatprep.subr.mxu0 0.0
    %831 = vmatpush1.msra.mxu0 %v791
    %832 = vmatprep.subr.mxu0 0.0
    %833 = vmatpush1.msra.mxu0 %v792
    %834 = vmatprep.subr.mxu0 0.0
    %835 = vmatpush1.msra.mxu0 %v793
    %836 = vmatprep.subr.mxu0 0.0
    %837 = vmatpush1.msra.mxu0 %v794
    %838 = vmatprep.subr.mxu0 0.0
    %839 = vmatpush1.msra.mxu0 %v795
    %840 = vmatprep.subr.mxu0 0.0
    %841 = vmatpush1.msra.mxu0 %v796
    %842 = vmatprep.subr.mxu0 0.0
    %843 = vmatpush1.msra.mxu0 %v797
    %844 = vmatprep.subr.mxu0 0.0
    %845 = vmatpush1.msra.mxu0 %v798
    %846 = vmatprep.subr.mxu0 0.0
    %847 = vmatpush1.msra.mxu0 %v799
    %848 = vmatprep.subr.mxu0 0.0
    %849 = vmatpush1.msra.mxu0 %v800
    %850 = vmatprep.subr.mxu0 0.0
    %851 = vmatpush1.msra.mxu0 %v801
    %852 = vmatprep.subr.mxu0 0.0
    %853 = vmatpush1.msra.mxu0 %v802
    %854 = vmatprep.subr.mxu0 0.0
    %855 = vmatpush1.msra.mxu0 %v803
    %856 = vmatprep.subr.mxu0 0.0
    %857 = vmatpush1.msra.mxu0 %v804
    %858 = vmatprep.subr.mxu0 0.0
    %859 = vmatpush1.msra.mxu0 %v805
    %860 = vmatprep.subr.mxu0 0.0
    %861 = vmatpush1.msra.mxu0 %v806
    %862 = vmatprep.subr.mxu0 0.0
    %863 = vmatpush1.msra.mxu0 %v812
    %864 = vmatprep.subr.mxu0 0.0
    %865 = vmatpush1.msra.mxu0 0.0
    %866 = vmatprep.subr.mxu0 0.0
    %867 = vmatpush1.msra.mxu0 0.0
    %868 = vmatprep.subr.mxu0 0.0
    %869 = vmatpush1.msra.mxu0 0.0
    %870 = vmatprep.subr.mxu0 0.0
    %871 = vmatpush1.msra.mxu0 0.0
    %872 = vmatprep.subr.mxu0 0.0
    %873 = vmatpush1.msra.mxu0 0.0
    %874 = vmatprep.subr.mxu0 0.0
    %875 = vmatpush1.msra.mxu0 0.0
    %876 = vmatprep.subr.mxu0 0.0
    %877 = vmatpush1.msra.mxu0 0.0
    %878 = vmatprep.mubr.f32.mxu0 %v809
    %879 = vmatmul.mubr.f32.gmra.mrb[0].mxu0 %v780
    %v880 = vpop.f32.mrb[0].mxu0
    %v881 = vadd.f32 0.0, %v880
    %v882 = vpop.f32.mrb[0].mxu0
    %883 = vdwg.mxu0
    %v884 = vadd.f32 %v771, %v881
    %v885 = vrot.slane %v120, 6
    %v886 = vrot.slane %v121, 6
    %v889 = vrot.slane %v210, 5
    %v890 = vrot.slane %v211, 5
    %v893 = vsel %vm218, %v885, %v889
    %v894 = vsel %vm218, %v886, %v890
    %s895 = scalar_lea.vmem %s3, 1200
    %v896 = vld [vmem:[%s895] sm:$0xff]
    %v897 = vld [vmem:[%s895 + $0x8] sm:$0xff]
    %v898 = vld [vmem:[%s895 + $0x10] sm:$0xff]
    %v899 = vld [vmem:[%s895 + $0x18] sm:$0xff]
    %v900 = vld [vmem:[%s895 + $0x20] sm:$0xff]
    %v901 = vld [vmem:[%s895 + $0x28] sm:$0xff]
    %v902 = vld [vmem:[%s895 + $0x30] sm:$0xff]
    %v903 = vld [vmem:[%s895 + $0x38] sm:$0xff]
    %v904 = vld [vmem:[%s895 + $0x40] sm:$0xff]
    %v905 = vld [vmem:[%s895 + $0x48] sm:$0xff]
    %v906 = vld [vmem:[%s895 + $0x50] sm:$0xff]
    %v907 = vld [vmem:[%s895 + $0x58] sm:$0xff]
    %v908 = vld [vmem:[%s895 + $0x60] sm:$0xff]
    %v909 = vld [vmem:[%s895 + $0x68] sm:$0xff]
    %v910 = vld [vmem:[%s895 + $0x70] sm:$0xff]
    %v911 = vld [vmem:[%s895 + $0x78] sm:$0xff]
    %v912 = vld [vmem:[%s895 + $0x80] sm:$0xff]
    %v913 = vld [vmem:[%s895 + $0x88] sm:$0xff]
    %v914 = vld [vmem:[%s895 + $0x90] sm:$0xff]
    %v915 = vld [vmem:[%s895 + $0x98] sm:$0xff]
    %v916 = vld [vmem:[%s895 + $0xa0] sm:$0xff]
    %v917 = vld [vmem:[%s895 + $0xa8] sm:$0xff]
    %v918 = vld [vmem:[%s895 + $0xb0] sm:$0xff]
    %v919 = vld [vmem:[%s895 + $0xb8] sm:$0xff]
    %v920 = vld [vmem:[%s895 + $0xc0] sm:$0xf]
    %v922 = vsel %vm280, %v894, 0
    %v925 = vsel %vm42, %v920, 0
    %927 = vmatprep.subr.mxu0 0.0
    %928 = vmatpush1.msra.mxu0 %v896
    %929 = vmatprep.subr.mxu0 0.0
    %930 = vmatpush1.msra.mxu0 %v897
    %931 = vmatprep.subr.mxu0 0.0
    %932 = vmatpush1.msra.mxu0 %v898
    %933 = vmatprep.subr.mxu0 0.0
    %934 = vmatpush1.msra.mxu0 %v899
    %935 = vmatprep.subr.mxu0 0.0
    %936 = vmatpush1.msra.mxu0 %v900
    %937 = vmatprep.subr.mxu0 0.0
    %938 = vmatpush1.msra.mxu0 %v901
    %939 = vmatprep.subr.mxu0 0.0
    %940 = vmatpush1.msra.mxu0 %v902
    %941 = vmatprep.subr.mxu0 0.0
    %942 = vmatpush1.msra.mxu0 %v903
    %943 = vmatprep.subr.mxu0 0.0
    %944 = vmatpush1.msra.mxu0 %v904
    %945 = vmatprep.subr.mxu0 0.0
    %946 = vmatpush1.msra.mxu0 %v905
    %947 = vmatprep.subr.mxu0 0.0
    %948 = vmatpush1.msra.mxu0 %v906
    %949 = vmatprep.subr.mxu0 0.0
    %950 = vmatpush1.msra.mxu0 %v907
    %951 = vmatprep.subr.mxu0 0.0
    %952 = vmatpush1.msra.mxu0 %v908
    %953 = vmatprep.subr.mxu0 0.0
    %954 = vmatpush1.msra.mxu0 %v909
    %955 = vmatprep.subr.mxu0 0.0
    %956 = vmatpush1.msra.mxu0 %v910
    %957 = vmatprep.subr.mxu0 0.0
    %958 = vmatpush1.msra.mxu0 %v911
    %959 = vmatprep.subr.mxu0 0.0
    %960 = vmatpush1.msra.mxu0 %v912
    %961 = vmatprep.subr.mxu0 0.0
    %962 = vmatpush1.msra.mxu0 %v913
    %963 = vmatprep.subr.mxu0 0.0
    %964 = vmatpush1.msra.mxu0 %v914
    %965 = vmatprep.subr.mxu0 0.0
    %966 = vmatpush1.msra.mxu0 %v915
    %967 = vmatprep.subr.mxu0 0.0
    %968 = vmatpush1.msra.mxu0 %v916
    %969 = vmatprep.subr.mxu0 0.0
    %970 = vmatpush1.msra.mxu0 %v917
    %971 = vmatprep.subr.mxu0 0.0
    %972 = vmatpush1.msra.mxu0 %v918
    %973 = vmatprep.subr.mxu0 0.0
    %974 = vmatpush1.msra.mxu0 %v919
    %975 = vmatprep.subr.mxu0 0.0
    %976 = vmatpush1.msra.mxu0 %v925
    %977 = vmatprep.subr.mxu0 0.0
    %978 = vmatpush1.msra.mxu0 0.0
    %979 = vmatprep.subr.mxu0 0.0
    %980 = vmatpush1.msra.mxu0 0.0
    %981 = vmatprep.subr.mxu0 0.0
    %982 = vmatpush1.msra.mxu0 0.0
    %983 = vmatprep.subr.mxu0 0.0
    %984 = vmatpush1.msra.mxu0 0.0
    %985 = vmatprep.subr.mxu0 0.0
    %986 = vmatpush1.msra.mxu0 0.0
    %987 = vmatprep.subr.mxu0 0.0
    %988 = vmatpush1.msra.mxu0 0.0
    %989 = vmatprep.subr.mxu0 0.0
    %990 = vmatpush1.msra.mxu0 0.0
    %991 = vmatprep.mubr.f32.mxu0 %v922
    %992 = vmatmul.mubr.f32.gmra.mrb[0].mxu0 %v893
    %v993 = vpop.f32.mrb[0].mxu0
    %v994 = vadd.f32 0.0, %v993
    %v995 = vpop.f32.mrb[0].mxu0
    %996 = vdwg.mxu0
    %v997 = vadd.f32 %v884, %v994
    %v998 = vrot.slane %v120, 7
    %v999 = vrot.slane %v121, 7
    %v1002 = vrot.slane %v210, 6
    %v1003 = vrot.slane %v211, 6
    %v1006 = vsel %vm218, %v998, %v1002
    %v1007 = vsel %vm218, %v999, %v1003
    %s1008 = scalar_lea.vmem %s3, 1400
    %v1009 = vld [vmem:[%s1008] sm:$0xff]
    %v1010 = vld [vmem:[%s1008 + $0x8] sm:$0xff]
    %v1011 = vld [vmem:[%s1008 + $0x10] sm:$0xff]
    %v1012 = vld [vmem:[%s1008 + $0x18] sm:$0xff]
    %v1013 = vld [vmem:[%s1008 + $0x20] sm:$0xff]
    %v1014 = vld [vmem:[%s1008 + $0x28] sm:$0xff]
    %v1015 = vld [vmem:[%s1008 + $0x30] sm:$0xff]
    %v1016 = vld [vmem:[%s1008 + $0x38] sm:$0xff]
    %v1017 = vld [vmem:[%s1008 + $0x40] sm:$0xff]
    %v1018 = vld [vmem:[%s1008 + $0x48] sm:$0xff]
    %v1019 = vld [vmem:[%s1008 + $0x50] sm:$0xff]
    %v1020 = vld [vmem:[%s1008 + $0x58] sm:$0xff]
    %v1021 = vld [vmem:[%s1008 + $0x60] sm:$0xff]
    %v1022 = vld [vmem:[%s1008 + $0x68] sm:$0xff]
    %v1023 = vld [vmem:[%s1008 + $0x70] sm:$0xff]
    %v1024 = vld [vmem:[%s1008 + $0x78] sm:$0xff]
    %v1025 = vld [vmem:[%s1008 + $0x80] sm:$0xff]
    %v1026 = vld [vmem:[%s1008 + $0x88] sm:$0xff]
    %v1027 = vld [vmem:[%s1008 + $0x90] sm:$0xff]
    %v1028 = vld [vmem:[%s1008 + $0x98] sm:$0xff]
    %v1029 = vld [vmem:[%s1008 + $0xa0] sm:$0xff]
    %v1030 = vld [vmem:[%s1008 + $0xa8] sm:$0xff]
    %v1031 = vld [vmem:[%s1008 + $0xb0] sm:$0xff]
    %v1032 = vld [vmem:[%s1008 + $0xb8] sm:$0xff]
    %v1033 = vld [vmem:[%s1008 + $0xc0] sm:$0xf]
    %v1035 = vsel %vm280, %v1007, 0
    %v1038 = vsel %vm42, %v1033, 0
    %1040 = vmatprep.subr.mxu0 0.0
    %1041 = vmatpush1.msra.mxu0 %v1009
    %1042 = vmatprep.subr.mxu0 0.0
    %1043 = vmatpush1.msra.mxu0 %v1010
    %1044 = vmatprep.subr.mxu0 0.0
    %1045 = vmatpush1.msra.mxu0 %v1011
    %1046 = vmatprep.subr.mxu0 0.0
    %1047 = vmatpush1.msra.mxu0 %v1012
    %1048 = vmatprep.subr.mxu0 0.0
    %1049 = vmatpush1.msra.mxu0 %v1013
    %1050 = vmatprep.subr.mxu0 0.0
    %1051 = vmatpush1.msra.mxu0 %v1014
    %1052 = vmatprep.subr.mxu0 0.0
    %1053 = vmatpush1.msra.mxu0 %v1015
    %1054 = vmatprep.subr.mxu0 0.0
    %1055 = vmatpush1.msra.mxu0 %v1016
    %1056 = vmatprep.subr.mxu0 0.0
    %1057 = vmatpush1.msra.mxu0 %v1017
    %1058 = vmatprep.subr.mxu0 0.0
    %1059 = vmatpush1.msra.mxu0 %v1018
    %1060 = vmatprep.subr.mxu0 0.0
    %1061 = vmatpush1.msra.mxu0 %v1019
    %1062 = vmatprep.subr.mxu0 0.0
    %1063 = vmatpush1.msra.mxu0 %v1020
    %1064 = vmatprep.subr.mxu0 0.0
    %1065 = vmatpush1.msra.mxu0 %v1021
    %1066 = vmatprep.subr.mxu0 0.0
    %1067 = vmatpush1.msra.mxu0 %v1022
    %1068 = vmatprep.subr.mxu0 0.0
    %1069 = vmatpush1.msra.mxu0 %v1023
    %1070 = vmatprep.subr.mxu0 0.0
    %1071 = vmatpush1.msra.mxu0 %v1024
    %1072 = vmatprep.subr.mxu0 0.0
    %1073 = vmatpush1.msra.mxu0 %v1025
    %1074 = vmatprep.subr.mxu0 0.0
    %1075 = vmatpush1.msra.mxu0 %v1026
    %1076 = vmatprep.subr.mxu0 0.0
    %1077 = vmatpush1.msra.mxu0 %v1027
    %1078 = vmatprep.subr.mxu0 0.0
    %1079 = vmatpush1.msra.mxu0 %v1028
    %1080 = vmatprep.subr.mxu0 0.0
    %1081 = vmatpush1.msra.mxu0 %v1029
    %1082 = vmatprep.subr.mxu0 0.0
    %1083 = vmatpush1.msra.mxu0 %v1030
    %1084 = vmatprep.subr.mxu0 0.0
    %1085 = vmatpush1.msra.mxu0 %v1031
    %1086 = vmatprep.subr.mxu0 0.0
    %1087 = vmatpush1.msra.mxu0 %v1032
    %1088 = vmatprep.subr.mxu0 0.0
    %1089 = vmatpush1.msra.mxu0 %v1038
    %1090 = vmatprep.subr.mxu0 0.0
    %1091 = vmatpush1.msra.mxu0 0.0
    %1092 = vmatprep.subr.mxu0 0.0
    %1093 = vmatpush1.msra.mxu0 0.0
    %1094 = vmatprep.subr.mxu0 0.0
    %1095 = vmatpush1.msra.mxu0 0.0
    %1096 = vmatprep.subr.mxu0 0.0
    %1097 = vmatpush1.msra.mxu0 0.0
    %1098 = vmatprep.subr.mxu0 0.0
    %1099 = vmatpush1.msra.mxu0 0.0
    %1100 = vmatprep.subr.mxu0 0.0
    %1101 = vmatpush1.msra.mxu0 0.0
    %1102 = vmatprep.subr.mxu0 0.0
    %1103 = vmatpush1.msra.mxu0 0.0
    %1104 = vmatprep.mubr.f32.mxu0 %v1035
    %1105 = vmatmul.mubr.f32.gmra.mrb[0].mxu0 %v1006
    %v1106 = vpop.f32.mrb[0].mxu0
    %v1107 = vadd.f32 0.0, %v1106
    %v1108 = vpop.f32.mrb[0].mxu0
    %1109 = vdwg.mxu0
    %v1110 = vadd.f32 %v997, %v1107
    %v1111 = vld [vmem:[%s4] sm:$0x1]
    %v1113 = vlaneseq
    %v1114 = vshrl.u32 %v1113, 7
    %v1115 = vsub.s32 0, %v1114
    %v1116 = vrot.slane %v1111, %v1115
    %v1118 = vadd.f32 %v1110, %v1116
    %vm1119 = vcmask 74752
    %v1120 = vsel %vm1119, %v1118, -inf
    %1121 = vmax.xlane.f32.xlu0 %v1120
    %v1122 = vpop.xlane.xlu0 %1121
    %v1123 = vsub.f32 %v1118, %v1122
    %v1124 = vmul.f32 %v1123, 1.442695
    %v1125 = vpow.pop %v1124
    %v1126 = vsel %vm1119, %v1125, 0.0
    %1127 = vadd.xlane.f32.xlu0 %v1126
    %v1128 = vpop.xlane.xlu0 %1127
    %v1129 = vlog2.pop %v1128
    %v1130 = vmul.f32 %v1129, 0.6931472
    %v1131 = vsub.f32 %v1123, %v1130
    %1132 = vst.msk [vmem:[#allocation2] sm:$0x3] %vm1119, %v1131
    // Predicated region
    $region22: #{net_forward.1} parent=1 // pred_check
      _
    $region23: #{net_forward.1} parent=1 // pred_check_branch
      %1134 = sbr.rel (0) target = $region25
    $region24: #{net_forward.1} parent=1 // pred_region
      %s1136 = ssub.s32 32, 32
      %1137 = vsyncadd [#allocation3], %s1136
      %s1139 = sshll.u32 [#allocation2], 4
      %s1140 = int_to_ptr.vmem [resolvable:$true] %s1139
      %1142 = dma.vmem_to_hbm [thread:$0]  %s1140, 32, %s5, [#allocation3]
    $region25: #{net_forward.1} parent=1 // pred_fallthru
      _
    // Predicated region
    $region26: #{net_forward.1} parent=1 // pred_check
      _
    $region27: #{net_forward.1} parent=1 // pred_check_branch
      %1144 = sbr.rel (0) target = $region29
    $region28: #{net_forward.1} parent=1 // pred_region
      %1145 = dma.done [#allocation3], 32
    $region29: #{net_forward.1} parent=1 // pred_fallthru
      _
    %1146 = vsyncpa [#allocation3], 1

</llo_original>
